<compile_context>
chip_gen: v5e
topology: v5e:2x2
jax: 0.10.0
libtpu: 0.0.40
codegen_flags: <defaults>
</compile_context>

<pallas_src>
import functools

import jax
import jax.numpy as jnp
from jax.experimental import pallas as pl
from jax.experimental.pallas import tpu as pltpu

P_DROP = 0.1
IN_FEATS = 28 * 28        # 784
HID = 128
OUT = 10
OUT_PAD = 128             # lane-dense fc3 output -> unmasked stores


def fcnet_kernel(seed_ref,                       # scalar-prefetch (SMEM)
                 x_ref, w1_ref, b1_ref, w2_ref, b2_ref, w3_ref, b3_ref,
                 o_ref, *, training):
    if training:
        # Seed once per grid step; seed + program_id is order-independent, so
        # the batch axis can stay "parallel".
        pltpu.prng_seed(seed_ref[0] + pl.program_id(0))
        keep_scale = jnp.float32(1.0 / (1.0 - P_DROP))
        thresh = jnp.uint32(int(P_DROP * (2 ** 32)))

    # --- fc1 + ReLU (+ dropout): bf16 MXU inputs, f32 accumulation ---
    x = x_ref[...].astype(jnp.bfloat16)                              # (tb, 784)
    h = jnp.dot(x, w1_ref[...], preferred_element_type=jnp.float32) + b1_ref[...]
    h = jnp.maximum(h, 0.0)                                          # (tb, 128) f32

    if training:
        bits1 = pltpu.bitcast(pltpu.prng_random_bits(h.shape), jnp.uint32)
        h = jnp.where(bits1 >= thresh, h * keep_scale, jnp.float32(0.0))

    # --- fc2 + ReLU (+ dropout) ---
    h2 = jnp.dot(h.astype(jnp.bfloat16), w2_ref[...],
                 preferred_element_type=jnp.float32) + b2_ref[...]
    h2 = jnp.maximum(h2, 0.0)                                        # (tb, 128) f32

    if training:
        bits2 = pltpu.bitcast(pltpu.prng_random_bits(h2.shape), jnp.uint32)
        h2 = jnp.where(bits2 >= thresh, h2 * keep_scale, jnp.float32(0.0))

    # --- fc3 (logits, padded to 128 lanes for an unmasked store) ---
    o_ref[...] = (jnp.dot(h2.astype(jnp.bfloat16), w3_ref[...],
                          preferred_element_type=jnp.float32)
                  + b3_ref[...]).astype(o_ref.dtype)                 # (tb, 128)


def prepare_params(params):
    """One-time weight prep (hoisted out of the per-call forward path):
    transpose to (in, out), cast matmul operands to bf16, pad fc3 to 128 lanes,
    keep biases in f32."""
    w1, b1, w2, b2, w3, b3 = params                    # PyTorch layout: (out, in)
    w1t = w1.T.astype(jnp.bfloat16)                    # (784, 128)
    w2t = w2.T.astype(jnp.bfloat16)                    # (128, 128)
    w3t = jnp.zeros((HID, OUT_PAD), jnp.bfloat16).at[:, :OUT].set(
        w3.T.astype(jnp.bfloat16))                     # (128, 128)
    b1r = b1.reshape(1, HID).astype(jnp.float32)
    b2r = b2.reshape(1, HID).astype(jnp.float32)
    b3r = jnp.zeros((1, OUT_PAD), jnp.float32).at[0, :OUT].set(
        b3.astype(jnp.float32))
    return (w1t, b1r, w2t, b2r, w3t, b3r)


def _round_up(n, m):
    return ((n + m - 1) // m) * m


def fcnet_forward(x, prepped, *, training=False, seed=0, tb=512):
    """x: any shape with 784 trailing elements per row (e.g. (B, 1, 28, 28)).
    `prepped` is the output of prepare_params (reused across calls)."""
    w1t, b1r, w2t, b2r, w3t, b3r = prepped
    x2 = x.reshape(-1, IN_FEATS).astype(jnp.float32)   # x.view(-1, 784); no padded copy
    B = x2.shape[0]

    # Batch tile: multiple of 8 (sublane) and <= B, so blocks never exceed the
    # array; ragged last tiles are handled by Pallas boundary masking.
    if B >= 8:
        tb_eff = min(tb, (B // 8) * 8)
    else:
        tb_eff = B                                     # block dim == full array dim
    # v7x has 2 TensorCores: ensure the "parallel" batch axis has >=2 steps
    # when the batch is large enough to be worth splitting.
    if B >= 512 and pl.cdiv(B, tb_eff) < 2:
        tb_eff = _round_up(pl.cdiv(B, 2), 8)
    grid = (pl.cdiv(B, tb_eff),)

    seed_arr = jnp.array([seed], dtype=jnp.int32)
    kernel = functools.partial(fcnet_kernel, training=training)

    flops = 2 * B * (IN_FEATS * HID + HID * HID + HID * OUT_PAD)
    bytes_accessed = (B * IN_FEATS * 4 + B * OUT_PAD * 4
                      + 2 * (IN_FEATS * HID + HID * HID + HID * OUT_PAD)
                      + 4 * (HID + HID + OUT_PAD))

    out = pl.pallas_call(
        kernel,
        out_shape=jax.ShapeDtypeStruct((B, OUT_PAD), jnp.float32),
        grid_spec=pltpu.PrefetchScalarGridSpec(
            num_scalar_prefetch=1,
            grid=grid,
            in_specs=[
                pl.BlockSpec((tb_eff, IN_FEATS), lambda i, seed: (i, 0)),  # x (last dim = full 784)
                pl.BlockSpec((IN_FEATS, HID),    lambda i, seed: (0, 0)),  # w1 (bf16)
                pl.BlockSpec((1, HID),           lambda i, seed: (0, 0)),  # b1
                pl.BlockSpec((HID, HID),         lambda i, seed: (0, 0)),  # w2 (bf16)
                pl.BlockSpec((1, HID),           lambda i, seed: (0, 0)),  # b2
                pl.BlockSpec((HID, OUT_PAD),     lambda i, seed: (0, 0)),  # w3 (bf16, padded)
                pl.BlockSpec((1, OUT_PAD),       lambda i, seed: (0, 0)),  # b3 (padded)
            ],
            out_specs=pl.BlockSpec((tb_eff, OUT_PAD), lambda i, seed: (i, 0)),
        ),
        compiler_params=pltpu.CompilerParams(
            dimension_semantics=("parallel",)),        # batch-parallel; 2x on v7x megacore
        cost_estimate=pl.CostEstimate(
            flops=flops, transcendentals=0, bytes_accessed=bytes_accessed),
    )(seed_arr, x2, w1t, b1r, w2t, b2r, w3t, b3r)
    return out[:, :OUT]


def init_params(key):
    """Deterministic init matching PyTorch nn.Linear default: U(-1/sqrt(in), 1/sqrt(in))."""
    def linear(key, fan_in, fan_out):
        kw, kb = jax.random.split(key)
        bound = 1.0 / jnp.sqrt(jnp.float32(fan_in))
        w = jax.random.uniform(kw, (fan_out, fan_in), jnp.float32, -bound, bound)
        b = jax.random.uniform(kb, (fan_out,), jnp.float32, -bound, bound)
        return w, b

    k1, k2, k3 = jax.random.split(key, 3)
    w1, b1 = linear(k1, IN_FEATS, HID)
    w2, b2 = linear(k2, HID, HID)
    w3, b3 = linear(k3, HID, OUT)
    return (w1, b1, w2, b2, w3, b3)


def fcnet_reference(x, params):
    """Pure-JAX f32 eval-mode reference (dropout is identity in eval)."""
    w1, b1, w2, b2, w3, b3 = params
    h = x.reshape(-1, IN_FEATS)
    h = jnp.maximum(h @ w1.T + b1, 0.0)
    h = jnp.maximum(h @ w2.T + b2, 0.0)
    return h @ w3.T + b3


if __name__ == "__main__":
    key = jax.random.PRNGKey(0)
    kx, kp = jax.random.split(key)

    B = 8
    x = jax.random.normal(kx, (B, 1, 28, 28), dtype=jnp.float32)   # NCHW MNIST-like input
    params = init_params(kp)
    prepped = prepare_params(params)          # one-time weight prep (hoisted)

    # Eval mode (dropout = identity), matching model.eval() forward semantics.
    out = jax.block_until_ready(fcnet_forward(x, prepped, training=False))
    ref = fcnet_reference(x, params)
    assert out.shape == (B, OUT)
    # bf16 matmul inputs with f32 accumulation -> looser tolerance than pure f32.
    assert jnp.allclose(out, ref, atol=3e-2, rtol=3e-2), "mismatch vs pure-JAX reference"

    # Ragged batch (not a multiple of the tile nor of 8) exercises Pallas
    # boundary masking of the last batch tile.
    B2 = 13
    x_ragged = jax.random.normal(kx, (B2, 1, 28, 28), dtype=jnp.float32)
    out2 = jax.block_until_ready(fcnet_forward(x_ragged, prepped, training=False))
    ref2 = fcnet_reference(x_ragged, params)
    assert out2.shape == (B2, OUT)
    assert jnp.allclose(out2, ref2, atol=3e-2, rtol=3e-2), "ragged-batch mismatch"

    # Training path (inverted dropout via the on-chip PRNG); needs real TPU HW.
    if jax.devices()[0].platform == "tpu":
        out_train = jax.block_until_ready(
            fcnet_forward(x, prepped, training=True, seed=123))
        assert out_train.shape == (B, OUT)

    print("KERNEL_OK")
</pallas_src>

<mosaic_0001>
module attributes {stable_mosaic.version = 11 : i64} {
  func.func @fcnet_kernel(%arg0: i32, %arg1: memref<1xi32, #tpu.memory_space<smem>>, %arg2: memref<8x784xf32, #tpu.memory_space<vmem>>, %arg3: memref<784x128xbf16, #tpu.memory_space<vmem>>, %arg4: memref<1x128xf32, #tpu.memory_space<vmem>>, %arg5: memref<128x128xbf16, #tpu.memory_space<vmem>>, %arg6: memref<1x128xf32, #tpu.memory_space<vmem>>, %arg7: memref<128x128xbf16, #tpu.memory_space<vmem>>, %arg8: memref<1x128xf32, #tpu.memory_space<vmem>>, %arg9: memref<8x128xf32, #tpu.memory_space<vmem>>) attributes {dimension_semantics = [#tpu.dimension_semantics<parallel>], iteration_bounds = array<i64: 1>, scalar_prefetch = 1 : i64, scratch_operands = 0 : i64, tpu.core_type = #tpu.core_type<tc>, window_params = [{transform_indices = @transform_0, window_bounds = array<i64: 8, 784>}, {pipeline_mode = #tpu.pipeline_mode<synchronous>, transform_indices = @transform_1, window_bounds = array<i64: 784, 128>}, {pipeline_mode = #tpu.pipeline_mode<synchronous>, transform_indices = @transform_2, window_bounds = array<i64: 1, 128>}, {pipeline_mode = #tpu.pipeline_mode<synchronous>, transform_indices = @transform_3, window_bounds = array<i64: 128, 128>}, {pipeline_mode = #tpu.pipeline_mode<synchronous>, transform_indices = @transform_4, window_bounds = array<i64: 1, 128>}, {pipeline_mode = #tpu.pipeline_mode<synchronous>, transform_indices = @transform_5, window_bounds = array<i64: 128, 128>}, {pipeline_mode = #tpu.pipeline_mode<synchronous>, transform_indices = @transform_6, window_bounds = array<i64: 1, 128>}, {transform_indices = @transform_7, window_bounds = array<i64: 8, 128>}]} {
    %c0 = arith.constant 0 : index
    %c0_0 = arith.constant 0 : index
    %0 = vector.load %arg2[%c0, %c0_0] : memref<8x784xf32, #tpu.memory_space<vmem>>, vector<8x784xf32>
    %1 = arith.truncf %0 : vector<8x784xf32> to vector<8x784xbf16>
    %c0_1 = arith.constant 0 : index
    %c0_2 = arith.constant 0 : index
    %2 = vector.load %arg3[%c0_1, %c0_2] : memref<784x128xbf16, #tpu.memory_space<vmem>>, vector<784x128xbf16>
    %cst = arith.constant dense<0.000000e+00> : vector<8x128xf32>
    %3 = tpu.matmul %1, %2, %cst {dimension_numbers = #tpu.dot_dimension_numbers<[1], [0], [0], [1], [0, 0, 1, 1], [], []>} : vector<8x784xbf16>, vector<784x128xbf16>, vector<8x128xf32> -> vector<8x128xf32>
    %c0_3 = arith.constant 0 : index
    %c0_4 = arith.constant 0 : index
    %4 = vector.load %arg4[%c0_3, %c0_4] : memref<1x128xf32, #tpu.memory_space<vmem>>, vector<1x128xf32>
    %5 = vector.broadcast %4 : vector<1x128xf32> to vector<8x128xf32>
    %6 = arith.addf %3, %5 : vector<8x128xf32>
    %cst_5 = arith.constant 0.000000e+00 : f32
    %7 = vector.broadcast %cst_5 : f32 to vector<8x128xf32>
    %8 = arith.maximumf %6, %7 : vector<8x128xf32>
    %9 = arith.truncf %8 : vector<8x128xf32> to vector<8x128xbf16>
    %c0_6 = arith.constant 0 : index
    %c0_7 = arith.constant 0 : index
    %10 = vector.load %arg5[%c0_6, %c0_7] : memref<128x128xbf16, #tpu.memory_space<vmem>>, vector<128x128xbf16>
    %cst_8 = arith.constant dense<0.000000e+00> : vector<8x128xf32>
    %11 = tpu.matmul %9, %10, %cst_8 {dimension_numbers = #tpu.dot_dimension_numbers<[1], [0], [0], [1], [0, 0, 1, 1], [], []>} : vector<8x128xbf16>, vector<128x128xbf16>, vector<8x128xf32> -> vector<8x128xf32>
    %c0_9 = arith.constant 0 : index
    %c0_10 = arith.constant 0 : index
    %12 = vector.load %arg6[%c0_9, %c0_10] : memref<1x128xf32, #tpu.memory_space<vmem>>, vector<1x128xf32>
    %13 = vector.broadcast %12 : vector<1x128xf32> to vector<8x128xf32>
    %14 = arith.addf %11, %13 : vector<8x128xf32>
    %cst_11 = arith.constant 0.000000e+00 : f32
    %15 = vector.broadcast %cst_11 : f32 to vector<8x128xf32>
    %16 = arith.maximumf %14, %15 : vector<8x128xf32>
    %17 = arith.truncf %16 : vector<8x128xf32> to vector<8x128xbf16>
    %c0_12 = arith.constant 0 : index
    %c0_13 = arith.constant 0 : index
    %18 = vector.load %arg7[%c0_12, %c0_13] : memref<128x128xbf16, #tpu.memory_space<vmem>>, vector<128x128xbf16>
    %cst_14 = arith.constant dense<0.000000e+00> : vector<8x128xf32>
    %19 = tpu.matmul %17, %18, %cst_14 {dimension_numbers = #tpu.dot_dimension_numbers<[1], [0], [0], [1], [0, 0, 1, 1], [], []>} : vector<8x128xbf16>, vector<128x128xbf16>, vector<8x128xf32> -> vector<8x128xf32>
    %c0_15 = arith.constant 0 : index
    %c0_16 = arith.constant 0 : index
    %20 = vector.load %arg8[%c0_15, %c0_16] : memref<1x128xf32, #tpu.memory_space<vmem>>, vector<1x128xf32>
    %21 = vector.broadcast %20 : vector<1x128xf32> to vector<8x128xf32>
    %22 = arith.addf %19, %21 : vector<8x128xf32>
    %c0_17 = arith.constant 0 : index
    %c0_18 = arith.constant 0 : index
    %23 = vector.load %arg9[%c0_17, %c0_18] : memref<8x128xf32, #tpu.memory_space<vmem>>, vector<8x128xf32>
    tpu.vector_store %arg9[%c0_17, %c0_18], %22 {strides = array<i32>} : memref<8x128xf32, #tpu.memory_space<vmem>>, vector<8x128xf32>,
    return
  }
  func.func @transform_0(%arg0: i32, %arg1: memref<1xi32, #tpu.memory_space<smem>>) -> (i32, i32) {
    %c0_i32 = arith.constant 0 : i32
    %c0_i32_0 = arith.constant 0 : i32
    return %arg0, %c0_i32 : i32, i32
  }
  func.func @transform_1(%arg0: i32, %arg1: memref<1xi32, #tpu.memory_space<smem>>) -> (i32, i32) {
    %c0_i32 = arith.constant 0 : i32
    %c0_i32_0 = arith.constant 0 : i32
    %c0_i32_1 = arith.constant 0 : i32
    return %c0_i32, %c0_i32_0 : i32, i32
  }
  func.func @transform_2(%arg0: i32, %arg1: memref<1xi32, #tpu.memory_space<smem>>) -> (i32, i32) {
    %c0_i32 = arith.constant 0 : i32
    %c0_i32_0 = arith.constant 0 : i32
    %c0_i32_1 = arith.constant 0 : i32
    return %c0_i32, %c0_i32_0 : i32, i32
  }
  func.func @transform_3(%arg0: i32, %arg1: memref<1xi32, #tpu.memory_space<smem>>) -> (i32, i32) {
    %c0_i32 = arith.constant 0 : i32
    %c0_i32_0 = arith.constant 0 : i32
    %c0_i32_1 = arith.constant 0 : i32
    return %c0_i32, %c0_i32_0 : i32, i32
  }
  func.func @transform_4(%arg0: i32, %arg1: memref<1xi32, #tpu.memory_space<smem>>) -> (i32, i32) {
    %c0_i32 = arith.constant 0 : i32
    %c0_i32_0 = arith.constant 0 : i32
    %c0_i32_1 = arith.constant 0 : i32
    return %c0_i32, %c0_i32_0 : i32, i32
  }
  func.func @transform_5(%arg0: i32, %arg1: memref<1xi32, #tpu.memory_space<smem>>) -> (i32, i32) {
    %c0_i32 = arith.constant 0 : i32
    %c0_i32_0 = arith.constant 0 : i32
    %c0_i32_1 = arith.constant 0 : i32
    return %c0_i32, %c0_i32_0 : i32, i32
  }
  func.func @transform_6(%arg0: i32, %arg1: memref<1xi32, #tpu.memory_space<smem>>) -> (i32, i32) {
    %c0_i32 = arith.constant 0 : i32
    %c0_i32_0 = arith.constant 0 : i32
    %c0_i32_1 = arith.constant 0 : i32
    return %c0_i32, %c0_i32_0 : i32, i32
  }
  func.func @transform_7(%arg0: i32, %arg1: memref<1xi32, #tpu.memory_space<smem>>) -> (i32, i32) {
    %c0_i32 = arith.constant 0 : i32
    %c0_i32_0 = arith.constant 0 : i32
    return %arg0, %c0_i32 : i32, i32
  }
}

</mosaic_0001>

<llo_original>
// kernel: tpu_custom_call.1
$region0: #{tpu_custom_call.1}
  #allocation0 [shape = 'u32[]', space=smem, size = 0x4, offset = 0x4, fixed_abs, tag = 'smem constant byte address 0x4 - core index']
  #allocation1 [shape = 'u32[72,128]{1,0:T(1,128)}', space=vmem, size = 0x9000, scoped, tag = 'internal scratch']
  #allocation2 [shape = 's32[1]{0}', space=sflag, size = 0x4, scoped, tag = 'scoped memory for tpu_custom_call.1']
  #allocation3 [shape = 's32[1]{0:T(128)S(6)}', space=smem, size = 0x200, scoped, tag = 'prefetched SMEM operand 0']
  %s0 = inlined_call_operand.<no memory space> [shape: s32[1], index: 0, kind: input, shape index: {}]
  %s1 = inlined_call_operand.hbm [shape: f32[8,784], index: 1, kind: input, shape index: {}]
  %s2 = inlined_call_operand.hbm [shape: bf16[784,128], index: 2, kind: input, shape index: {}]
  %s3 = inlined_call_operand.vmem [shape: f32[1,128], index: 3, kind: input, shape index: {}]
  %s4 = inlined_call_operand.hbm [shape: bf16[128,128], index: 4, kind: input, shape index: {}]
  %s5 = inlined_call_operand.vmem [shape: f32[1,128], index: 5, kind: input, shape index: {}]
  %s6 = inlined_call_operand.hbm [shape: bf16[128,128], index: 6, kind: input, shape index: {}]
  %s7 = inlined_call_operand.vmem [shape: f32[1,128], index: 7, kind: input, shape index: {}]
  %s8 = inlined_call_operand.hbm [shape: f32[8,128], index: 8, kind: output, shape index: {}]
  %s9 = sld [smem:[#allocation0]]
  $region54: #{tpu_custom_call.1} parent=0
    _
  %s11 = ssub.s32 1, %s9
  %s12 = scalar_select 0, %s11, %s9
  %13 = sst [smem:[#allocation3]] %s0
  $region1: #{tpu_custom_call.1} parent=0
    #allocation4 [shape = 'u8[28672]{0}', space=vmem, size = 0x7000, scoped, tag = 'input window, operand 1, single buffered']
    #allocation5 [shape = 's32[1]{0}', space=sflag, size = 0x4, scoped, tag = 'scoped memory for tpu_custom_call.1']
    #allocation6 [shape = 's32[1]{0}', space=sflag, size = 0x4, scoped, tag = 'scoped memory for tpu_custom_call.1']
    #allocation7 [shape = 'u8[200704]{0}', space=vmem, size = 0x31000, scoped, tag = 'input window, operand 2, single buffered']
    #allocation8 [shape = 's32[1]{0}', space=sflag, size = 0x4, scoped, tag = 'scoped memory for tpu_custom_call.1']
    #allocation9 [shape = 'u8[32768]{0}', space=vmem, size = 0x8000, scoped, tag = 'input window, operand 4, single buffered']
    #allocation10 [shape = 'u8[32768]{0}', space=vmem, size = 0x8000, scoped, tag = 'input window, operand 6, single buffered']
    #allocation11 [shape = 's32[1]{0}', space=sflag, size = 0x4, scoped, tag = 'scoped memory for tpu_custom_call.1']
    #allocation12 [shape = 'u8[4096]{0}', space=vmem, size = 0x1000, scoped, tag = 'output window, operand 0, single buffered']
    %14 = vsyncpa [#allocation5], 0
    %15 = vsyncpa [#allocation8], 0
    %16 = vsyncpa [#allocation11], 0
    %17 = vsyncpa [#allocation6], 0
    // Predicated region
    $region2: #{tpu_custom_call.1} parent=1 // pred_check
      _
    $region3: #{tpu_custom_call.1} parent=1 // pred_check_branch
      %19 = sbr.rel (0) target = $region5
    $region4: #{tpu_custom_call.1} parent=1 // pred_region
      %21 = vsyncadd [#allocation5], 0
      %s23 = sshll.u32 %s1, 4
      %s24 = int_to_ptr.hbm [resolvable:$true] %s23
      %s25 = sshll.u32 [#allocation4], 4
      %s26 = int_to_ptr.vmem [resolvable:$true] %s25
      %28 = dma.hbm_to_vmem [thread:$0]  %s24, 896, %s26, [#allocation5]
    $region5: #{tpu_custom_call.1} parent=1 // pred_fallthru
      _
    // Predicated region
    $region6: #{tpu_custom_call.1} parent=1 // pred_check
      _
    $region7: #{tpu_custom_call.1} parent=1 // pred_check_branch
      %30 = sbr.rel (0) target = $region9
    $region8: #{tpu_custom_call.1} parent=1 // pred_region
      %32 = vsyncadd [#allocation8], 0
      %s33 = sshll.u32 %s2, 4
      %s34 = int_to_ptr.hbm [resolvable:$true] %s33
      %s35 = sshll.u32 [#allocation7], 4
      %s36 = int_to_ptr.vmem [resolvable:$true] %s35
      %41 = dma.hbm_to_vmem [thread:$0]  %s34, 6272, %s36, [#allocation8], 64, 64, 4
    $region9: #{tpu_custom_call.1} parent=1 // pred_fallthru
      _
    // Predicated region
    $region10: #{tpu_custom_call.1} parent=1 // pred_check
      _
    $region11: #{tpu_custom_call.1} parent=1 // pred_check_branch
      %43 = sbr.rel (0) target = $region13
    $region12: #{tpu_custom_call.1} parent=1 // pred_region
      _
    $region13: #{tpu_custom_call.1} parent=1 // pred_fallthru
      _
    // Predicated region
    $region14: #{tpu_custom_call.1} parent=1 // pred_check
      _
    $region15: #{tpu_custom_call.1} parent=1 // pred_check_branch
      %45 = sbr.rel (0) target = $region17
    $region16: #{tpu_custom_call.1} parent=1 // pred_region
      %47 = vsyncadd [#allocation8], 0
      %s48 = sshll.u32 %s4, 4
      %s49 = int_to_ptr.hbm [resolvable:$true] %s48
      %s50 = sshll.u32 [#allocation9], 4
      %s51 = int_to_ptr.vmem [resolvable:$true] %s50
      %56 = dma.hbm_to_vmem [thread:$0]  %s49, 1024, %s51, [#allocation8], 64, 64, 4
    $region17: #{tpu_custom_call.1} parent=1 // pred_fallthru
      _
    // Predicated region
    $region18: #{tpu_custom_call.1} parent=1 // pred_check
      _
    $region19: #{tpu_custom_call.1} parent=1 // pred_check_branch
      %58 = sbr.rel (0) target = $region21
    $region20: #{tpu_custom_call.1} parent=1 // pred_region
      _
    $region21: #{tpu_custom_call.1} parent=1 // pred_fallthru
      _
    // Predicated region
    $region22: #{tpu_custom_call.1} parent=1 // pred_check
      _
    $region23: #{tpu_custom_call.1} parent=1 // pred_check_branch
      %60 = sbr.rel (0) target = $region25
    $region24: #{tpu_custom_call.1} parent=1 // pred_region
      %62 = vsyncadd [#allocation11], 0
      %s63 = sshll.u32 %s6, 4
      %s64 = int_to_ptr.hbm [resolvable:$true] %s63
      %s65 = sshll.u32 [#allocation10], 4
      %s66 = int_to_ptr.vmem [resolvable:$true] %s65
      %71 = dma.hbm_to_vmem [thread:$0]  %s64, 1024, %s66, [#allocation11], 64, 64, 4
    $region25: #{tpu_custom_call.1} parent=1 // pred_fallthru
      _
    // Predicated region
    $region26: #{tpu_custom_call.1} parent=1 // pred_check
      _
    $region27: #{tpu_custom_call.1} parent=1 // pred_check_branch
      %73 = sbr.rel (0) target = $region29
    $region28: #{tpu_custom_call.1} parent=1 // pred_region
      _
    $region29: #{tpu_custom_call.1} parent=1 // pred_fallthru
      _
    // Predicated region
    $region30: #{tpu_custom_call.1} parent=1 // pred_check
      _
    $region31: #{tpu_custom_call.1} parent=1 // pred_check_branch
      %75 = sbr.rel (0) target = $region33
    $region32: #{tpu_custom_call.1} parent=1 // pred_region
      %77 = dma.done [#allocation5], 896
    $region33: #{tpu_custom_call.1} parent=1 // pred_fallthru
      _
    // Predicated region
    $region34: #{tpu_custom_call.1} parent=1 // pred_check
      _
    $region35: #{tpu_custom_call.1} parent=1 // pred_check_branch
      %79 = sbr.rel (0) target = $region37
    $region36: #{tpu_custom_call.1} parent=1 // pred_region
      %81 = dma.done [#allocation8], 6272
    $region37: #{tpu_custom_call.1} parent=1 // pred_fallthru
      _
    // Predicated region
    $region38: #{tpu_custom_call.1} parent=1 // pred_check
      _
    $region39: #{tpu_custom_call.1} parent=1 // pred_check_branch
      %83 = sbr.rel (0) target = $region41
    $region40: #{tpu_custom_call.1} parent=1 // pred_region
      %85 = dma.done [#allocation8], 1024
    $region41: #{tpu_custom_call.1} parent=1 // pred_fallthru
      _
    // Predicated region
    $region42: #{tpu_custom_call.1} parent=1 // pred_check
      _
    $region43: #{tpu_custom_call.1} parent=1 // pred_check_branch
      %87 = sbr.rel (0) target = $region45
    $region44: #{tpu_custom_call.1} parent=1 // pred_region
      %89 = dma.done [#allocation11], 1024
    $region45: #{tpu_custom_call.1} parent=1 // pred_fallthru
      _
    %v91 = vld [vmem:[#allocation4] sm:$0xff]
    %v92 = vld [vmem:[#allocation4 + $0x8] sm:$0xff]
    %v93 = vld [vmem:[#allocation4 + $0x10] sm:$0xff]
    %v94 = vld [vmem:[#allocation4 + $0x18] sm:$0xff]
    %v95 = vld [vmem:[#allocation4 + $0x20] sm:$0xff]
    %v96 = vld [vmem:[#allocation4 + $0x28] sm:$0xff]
    %v97 = vld [vmem:[#allocation4 + $0x30] sm:$0xff]
    %v98 = vpack.c.bf16 %v91, %v91
    %v99 = vpack.c.bf16 %v92, %v92
    %v100 = vpack.c.bf16 %v93, %v93
    %v101 = vpack.c.bf16 %v94, %v94
    %v102 = vpack.c.bf16 %v95, %v95
    %v103 = vpack.c.bf16 %v96, %v96
    %v104 = vpack.c.bf16 %v97, %v97
    %v105 = vld [vmem:[#allocation7] sm:$0xf]
    %v106 = vld [vmem:[#allocation7 + $0x4] sm:$0xf]
    %v107 = vld [vmem:[#allocation7 + $0x8] sm:$0xf]
    %v108 = vld [vmem:[#allocation7 + $0xc] sm:$0xf]
    %v109 = vld [vmem:[#allocation7 + $0x10] sm:$0xf]
    %v110 = vld [vmem:[#allocation7 + $0x14] sm:$0xf]
    %v111 = vld [vmem:[#allocation7 + $0x18] sm:$0xf]
    %v112 = vld [vmem:[#allocation7 + $0x1c] sm:$0xf]
    %v113 = vld [vmem:[#allocation7 + $0x20] sm:$0xf]
    %v114 = vld [vmem:[#allocation7 + $0x24] sm:$0xf]
    %v115 = vld [vmem:[#allocation7 + $0x28] sm:$0xf]
    %v116 = vld [vmem:[#allocation7 + $0x2c] sm:$0xf]
    %v117 = vld [vmem:[#allocation7 + $0x30] sm:$0xf]
    %v118 = vld [vmem:[#allocation7 + $0x34] sm:$0xf]
    %v119 = vld [vmem:[#allocation7 + $0x38] sm:$0xf]
    %v120 = vld [vmem:[#allocation7 + $0x3c] sm:$0xf]
    %v121 = vld [vmem:[#allocation7 + $0x40] sm:$0xf]
    %v122 = vld [vmem:[#allocation7 + $0x44] sm:$0xf]
    %v123 = vld [vmem:[#allocation7 + $0x48] sm:$0xf]
    %v124 = vld [vmem:[#allocation7 + $0x4c] sm:$0xf]
    %v125 = vld [vmem:[#allocation7 + $0x50] sm:$0xf]
    %v126 = vld [vmem:[#allocation7 + $0x54] sm:$0xf]
    %v127 = vld [vmem:[#allocation7 + $0x58] sm:$0xf]
    %v128 = vld [vmem:[#allocation7 + $0x5c] sm:$0xf]
    %v129 = vld [vmem:[#allocation7 + $0x60] sm:$0xf]
    %v130 = vld [vmem:[#allocation7 + $0x64] sm:$0xf]
    %v131 = vld [vmem:[#allocation7 + $0x68] sm:$0xf]
    %v132 = vld [vmem:[#allocation7 + $0x6c] sm:$0xf]
    %v133 = vld [vmem:[#allocation7 + $0x70] sm:$0xf]
    %v134 = vld [vmem:[#allocation7 + $0x74] sm:$0xf]
    %v135 = vld [vmem:[#allocation7 + $0x78] sm:$0xf]
    %v136 = vld [vmem:[#allocation7 + $0x7c] sm:$0xf]
    %v137 = vld [vmem:[#allocation7 + $0x80] sm:$0xf]
    %v138 = vld [vmem:[#allocation7 + $0x84] sm:$0xf]
    %v139 = vld [vmem:[#allocation7 + $0x88] sm:$0xf]
    %v140 = vld [vmem:[#allocation7 + $0x8c] sm:$0xf]
    %v141 = vld [vmem:[#allocation7 + $0x90] sm:$0xf]
    %v142 = vld [vmem:[#allocation7 + $0x94] sm:$0xf]
    %v143 = vld [vmem:[#allocation7 + $0x98] sm:$0xf]
    %v144 = vld [vmem:[#allocation7 + $0x9c] sm:$0xf]
    %v145 = vld [vmem:[#allocation7 + $0xa0] sm:$0xf]
    %v146 = vld [vmem:[#allocation7 + $0xa4] sm:$0xf]
    %v147 = vld [vmem:[#allocation7 + $0xa8] sm:$0xf]
    %v148 = vld [vmem:[#allocation7 + $0xac] sm:$0xf]
    %v149 = vld [vmem:[#allocation7 + $0xb0] sm:$0xf]
    %v150 = vld [vmem:[#allocation7 + $0xb4] sm:$0xf]
    %v151 = vld [vmem:[#allocation7 + $0xb8] sm:$0xf]
    %v152 = vld [vmem:[#allocation7 + $0xbc] sm:$0xf]
    %v153 = vld [vmem:[#allocation7 + $0xc0] sm:$0xf]
    %v154 = vld [vmem:[#allocation7 + $0xc4] sm:$0xf]
    %v155 = vld [vmem:[#allocation7 + $0xc8] sm:$0xf]
    %v156 = vld [vmem:[#allocation7 + $0xcc] sm:$0xf]
    %v157 = vld [vmem:[#allocation7 + $0xd0] sm:$0xf]
    %v158 = vld [vmem:[#allocation7 + $0xd4] sm:$0xf]
    %v159 = vld [vmem:[#allocation7 + $0xd8] sm:$0xf]
    %v160 = vld [vmem:[#allocation7 + $0xdc] sm:$0xf]
    %v161 = vld [vmem:[#allocation7 + $0xe0] sm:$0xf]
    %v162 = vld [vmem:[#allocation7 + $0xe4] sm:$0xf]
    %v163 = vld [vmem:[#allocation7 + $0xe8] sm:$0xf]
    %v164 = vld [vmem:[#allocation7 + $0xec] sm:$0xf]
    %v165 = vld [vmem:[#allocation7 + $0xf0] sm:$0xf]
    %v166 = vld [vmem:[#allocation7 + $0xf4] sm:$0xf]
    %v167 = vld [vmem:[#allocation7 + $0xf8] sm:$0xf]
    %v168 = vld [vmem:[#allocation7 + $0xfc] sm:$0xf]
    %v169 = vld [vmem:[#allocation7 + $0x100] sm:$0xf]
    %v170 = vld [vmem:[#allocation7 + $0x104] sm:$0xf]
    %v171 = vld [vmem:[#allocation7 + $0x108] sm:$0xf]
    %v172 = vld [vmem:[#allocation7 + $0x10c] sm:$0xf]
    %v173 = vld [vmem:[#allocation7 + $0x110] sm:$0xf]
    %v174 = vld [vmem:[#allocation7 + $0x114] sm:$0xf]
    %v175 = vld [vmem:[#allocation7 + $0x118] sm:$0xf]
    %v176 = vld [vmem:[#allocation7 + $0x11c] sm:$0xf]
    %v177 = vld [vmem:[#allocation7 + $0x120] sm:$0xf]
    %v178 = vld [vmem:[#allocation7 + $0x124] sm:$0xf]
    %v179 = vld [vmem:[#allocation7 + $0x128] sm:$0xf]
    %v180 = vld [vmem:[#allocation7 + $0x12c] sm:$0xf]
    %v181 = vld [vmem:[#allocation7 + $0x130] sm:$0xf]
    %v182 = vld [vmem:[#allocation7 + $0x134] sm:$0xf]
    %v183 = vld [vmem:[#allocation7 + $0x138] sm:$0xf]
    %v184 = vld [vmem:[#allocation7 + $0x13c] sm:$0xf]
    %v185 = vld [vmem:[#allocation7 + $0x140] sm:$0xf]
    %v186 = vld [vmem:[#allocation7 + $0x144] sm:$0xf]
    %v187 = vld [vmem:[#allocation7 + $0x148] sm:$0xf]
    %v188 = vld [vmem:[#allocation7 + $0x14c] sm:$0xf]
    %v189 = vld [vmem:[#allocation7 + $0x150] sm:$0xf]
    %v190 = vld [vmem:[#allocation7 + $0x154] sm:$0xf]
    %v191 = vld [vmem:[#allocation7 + $0x158] sm:$0xf]
    %v192 = vld [vmem:[#allocation7 + $0x15c] sm:$0xf]
    %v193 = vld [vmem:[#allocation7 + $0x160] sm:$0xf]
    %v194 = vld [vmem:[#allocation7 + $0x164] sm:$0xf]
    %v195 = vld [vmem:[#allocation7 + $0x168] sm:$0xf]
    %v196 = vld [vmem:[#allocation7 + $0x16c] sm:$0xf]
    %v197 = vld [vmem:[#allocation7 + $0x170] sm:$0xf]
    %v198 = vld [vmem:[#allocation7 + $0x174] sm:$0xf]
    %v199 = vld [vmem:[#allocation7 + $0x178] sm:$0xf]
    %v200 = vld [vmem:[#allocation7 + $0x17c] sm:$0xf]
    %v201 = vld [vmem:[#allocation7 + $0x180] sm:$0xf]
    %v202 = vld [vmem:[#allocation7 + $0x184] sm:$0xf]
    %v203 = vld [vmem:[%s3] sm:$0x1]
    %v205 = vperm.slane %v203, 0
    %v305 = vunpack.c.l.b16 %v105
    %v306 = vunpack.c.l.b16 %v106
    %v307 = vunpack.c.l.b16 %v107
    %v308 = vunpack.c.l.b16 %v108
    %v309 = vunpack.c.l.b16 %v109
    %v310 = vunpack.c.l.b16 %v110
    %v311 = vunpack.c.l.b16 %v111
    %v312 = vunpack.c.l.b16 %v112
    %v313 = vunpack.c.l.b16 %v113
    %v314 = vunpack.c.l.b16 %v114
    %v315 = vunpack.c.l.b16 %v115
    %v316 = vunpack.c.l.b16 %v116
    %v317 = vunpack.c.l.b16 %v117
    %v318 = vunpack.c.l.b16 %v118
    %v319 = vunpack.c.l.b16 %v119
    %v320 = vunpack.c.l.b16 %v120
    %v321 = vunpack.c.l.b16 %v121
    %v322 = vunpack.c.l.b16 %v122
    %v323 = vunpack.c.l.b16 %v123
    %v324 = vunpack.c.l.b16 %v124
    %v325 = vunpack.c.l.b16 %v125
    %v326 = vunpack.c.l.b16 %v126
    %v327 = vunpack.c.l.b16 %v127
    %v328 = vunpack.c.l.b16 %v128
    %v329 = vunpack.c.l.b16 %v129
    %v330 = vunpack.c.l.b16 %v130
    %v331 = vunpack.c.l.b16 %v131
    %v332 = vunpack.c.l.b16 %v132
    %v333 = vunpack.c.l.b16 %v133
    %v334 = vunpack.c.l.b16 %v134
    %v335 = vunpack.c.l.b16 %v135
    %v336 = vunpack.c.l.b16 %v136
    %v337 = vunpack.c.l.b16 %v137
    %v338 = vunpack.c.l.b16 %v138
    %v339 = vunpack.c.l.b16 %v139
    %v340 = vunpack.c.l.b16 %v140
    %v341 = vunpack.c.l.b16 %v141
    %v342 = vunpack.c.l.b16 %v142
    %v343 = vunpack.c.l.b16 %v143
    %v344 = vunpack.c.l.b16 %v144
    %v345 = vunpack.c.l.b16 %v145
    %v346 = vunpack.c.l.b16 %v146
    %v347 = vunpack.c.l.b16 %v147
    %v348 = vunpack.c.l.b16 %v148
    %v349 = vunpack.c.l.b16 %v149
    %v350 = vunpack.c.l.b16 %v150
    %v351 = vunpack.c.l.b16 %v151
    %v352 = vunpack.c.l.b16 %v152
    %v353 = vunpack.c.l.b16 %v153
    %v354 = vunpack.c.l.b16 %v154
    %v355 = vunpack.c.l.b16 %v155
    %v356 = vunpack.c.l.b16 %v156
    %v357 = vunpack.c.l.b16 %v157
    %v358 = vunpack.c.l.b16 %v158
    %v359 = vunpack.c.l.b16 %v159
    %v360 = vunpack.c.l.b16 %v160
    %v361 = vunpack.c.l.b16 %v161
    %v362 = vunpack.c.l.b16 %v162
    %v363 = vunpack.c.l.b16 %v163
    %v364 = vunpack.c.l.b16 %v164
    %v365 = vunpack.c.l.b16 %v165
    %v366 = vunpack.c.l.b16 %v166
    %v367 = vunpack.c.l.b16 %v167
    %v368 = vunpack.c.l.b16 %v168
    %v369 = vunpack.c.l.b16 %v169
    %v370 = vunpack.c.l.b16 %v170
    %v371 = vunpack.c.l.b16 %v171
    %v372 = vunpack.c.l.b16 %v172
    %v373 = vunpack.c.l.b16 %v173
    %v374 = vunpack.c.l.b16 %v174
    %v375 = vunpack.c.l.b16 %v175
    %v376 = vunpack.c.l.b16 %v176
    %v377 = vunpack.c.l.b16 %v177
    %v378 = vunpack.c.l.b16 %v178
    %v379 = vunpack.c.l.b16 %v179
    %v380 = vunpack.c.l.b16 %v180
    %v381 = vunpack.c.l.b16 %v181
    %v382 = vunpack.c.l.b16 %v182
    %v383 = vunpack.c.l.b16 %v183
    %v384 = vunpack.c.l.b16 %v184
    %v385 = vunpack.c.l.b16 %v185
    %v386 = vunpack.c.l.b16 %v186
    %v387 = vunpack.c.l.b16 %v187
    %v388 = vunpack.c.l.b16 %v188
    %v389 = vunpack.c.l.b16 %v189
    %v390 = vunpack.c.l.b16 %v190
    %v391 = vunpack.c.l.b16 %v191
    %v392 = vunpack.c.l.b16 %v192
    %v393 = vunpack.c.l.b16 %v193
    %v394 = vunpack.c.l.b16 %v194
    %v395 = vunpack.c.l.b16 %v195
    %v396 = vunpack.c.l.b16 %v196
    %v397 = vunpack.c.l.b16 %v197
    %v398 = vunpack.c.l.b16 %v198
    %v399 = vunpack.c.l.b16 %v199
    %v400 = vunpack.c.l.b16 %v200
    %v401 = vunpack.c.l.b16 %v201
    %v402 = vunpack.c.l.b16 %v202
    %v403 = vpack.c.b16 %v306, %v305
    %v404 = vpack.c.b16 %v308, %v307
    %v405 = vpack.c.b16 %v310, %v309
    %v406 = vpack.c.b16 %v312, %v311
    %v407 = vpack.c.b16 %v314, %v313
    %v408 = vpack.c.b16 %v316, %v315
    %v409 = vpack.c.b16 %v318, %v317
    %v410 = vpack.c.b16 %v320, %v319
    %v411 = vpack.c.b16 %v322, %v321
    %v412 = vpack.c.b16 %v324, %v323
    %v413 = vpack.c.b16 %v326, %v325
    %v414 = vpack.c.b16 %v328, %v327
    %v415 = vpack.c.b16 %v330, %v329
    %v416 = vpack.c.b16 %v332, %v331
    %v417 = vpack.c.b16 %v334, %v333
    %v418 = vpack.c.b16 %v336, %v335
    %v419 = vpack.c.b16 %v338, %v337
    %v420 = vpack.c.b16 %v340, %v339
    %v421 = vpack.c.b16 %v342, %v341
    %v422 = vpack.c.b16 %v344, %v343
    %v423 = vpack.c.b16 %v346, %v345
    %v424 = vpack.c.b16 %v348, %v347
    %v425 = vpack.c.b16 %v350, %v349
    %v426 = vpack.c.b16 %v352, %v351
    %v427 = vpack.c.b16 %v354, %v353
    %v428 = vpack.c.b16 %v356, %v355
    %v429 = vpack.c.b16 %v358, %v357
    %v430 = vpack.c.b16 %v360, %v359
    %v431 = vpack.c.b16 %v362, %v361
    %v432 = vpack.c.b16 %v364, %v363
    %v433 = vpack.c.b16 %v366, %v365
    %v434 = vpack.c.b16 %v368, %v367
    %v435 = vpack.c.b16 %v370, %v369
    %v436 = vpack.c.b16 %v372, %v371
    %v437 = vpack.c.b16 %v374, %v373
    %v438 = vpack.c.b16 %v376, %v375
    %v439 = vpack.c.b16 %v378, %v377
    %v440 = vpack.c.b16 %v380, %v379
    %v441 = vpack.c.b16 %v382, %v381
    %v442 = vpack.c.b16 %v384, %v383
    %v443 = vpack.c.b16 %v386, %v385
    %v444 = vpack.c.b16 %v388, %v387
    %v445 = vpack.c.b16 %v390, %v389
    %v446 = vpack.c.b16 %v392, %v391
    %v447 = vpack.c.b16 %v394, %v393
    %v448 = vpack.c.b16 %v396, %v395
    %v449 = vpack.c.b16 %v398, %v397
    %v450 = vpack.c.b16 %v400, %v399
    %v451 = vpack.c.b16 %v402, %v401
    %vm501 = vcmask 130048
    %v503 = vsel %vm501, %v104, 0
    %505 = vmatpush.bf16.msra.mxu0 %v410
    %506 = vmatpush.bf16.msra.mxu0 %v409
    %507 = vmatpush.bf16.msra.mxu0 %v408
    %508 = vmatpush.bf16.msra.mxu0 %v407
    %509 = vmatpush.bf16.msra.mxu0 %v406
    %510 = vmatpush.bf16.msra.mxu0 %v405
    %511 = vmatpush.bf16.msra.mxu0 %v404
    %512 = vmatpush.bf16.msra.mxu0 %v403
    %513 = vmatmul.bf16.gmra.mxu0 %v98
    %v514 = vpop.f32.mrf.mxu0
    %v515 = vadd.f32 %v205, %v514
    %v516 = vpop.f32.mrf.mxu0
    %517 = vdwg.mxu0
    %518 = vmatpush.bf16.msra.mxu0 %v418
    %519 = vmatpush.bf16.msra.mxu0 %v417
    %520 = vmatpush.bf16.msra.mxu0 %v416
    %521 = vmatpush.bf16.msra.mxu0 %v415
    %522 = vmatpush.bf16.msra.mxu0 %v414
    %523 = vmatpush.bf16.msra.mxu0 %v413
    %524 = vmatpush.bf16.msra.mxu0 %v412
    %525 = vmatpush.bf16.msra.mxu0 %v411
    %526 = vmatmul.bf16.gmra.mxu0 %v99
    %v527 = vpop.f32.mrf.mxu0
    %v528 = vadd.f32 %v515, %v527
    %v529 = vpop.f32.mrf.mxu0
    %530 = vdwg.mxu0
    %531 = vmatpush.bf16.msra.mxu0 %v426
    %532 = vmatpush.bf16.msra.mxu0 %v425
    %533 = vmatpush.bf16.msra.mxu0 %v424
    %534 = vmatpush.bf16.msra.mxu0 %v423
    %535 = vmatpush.bf16.msra.mxu0 %v422
    %536 = vmatpush.bf16.msra.mxu0 %v421
    %537 = vmatpush.bf16.msra.mxu0 %v420
    %538 = vmatpush.bf16.msra.mxu0 %v419
    %539 = vmatmul.bf16.gmra.mxu0 %v100
    %v540 = vpop.f32.mrf.mxu0
    %v541 = vadd.f32 %v528, %v540
    %v542 = vpop.f32.mrf.mxu0
    %543 = vdwg.mxu0
    %544 = vmatpush.bf16.msra.mxu0 %v434
    %545 = vmatpush.bf16.msra.mxu0 %v433
    %546 = vmatpush.bf16.msra.mxu0 %v432
    %547 = vmatpush.bf16.msra.mxu0 %v431
    %548 = vmatpush.bf16.msra.mxu0 %v430
    %549 = vmatpush.bf16.msra.mxu0 %v429
    %550 = vmatpush.bf16.msra.mxu0 %v428
    %551 = vmatpush.bf16.msra.mxu0 %v427
    %552 = vmatmul.bf16.gmra.mxu0 %v101
    %v553 = vpop.f32.mrf.mxu0
    %v554 = vadd.f32 %v541, %v553
    %v555 = vpop.f32.mrf.mxu0
    %556 = vdwg.mxu0
    %557 = vmatpush.bf16.msra.mxu0 %v442
    %558 = vmatpush.bf16.msra.mxu0 %v441
    %559 = vmatpush.bf16.msra.mxu0 %v440
    %560 = vmatpush.bf16.msra.mxu0 %v439
    %561 = vmatpush.bf16.msra.mxu0 %v438
    %562 = vmatpush.bf16.msra.mxu0 %v437
    %563 = vmatpush.bf16.msra.mxu0 %v436
    %564 = vmatpush.bf16.msra.mxu0 %v435
    %565 = vmatmul.bf16.gmra.mxu0 %v102
    %v566 = vpop.f32.mrf.mxu0
    %v567 = vadd.f32 %v554, %v566
    %v568 = vpop.f32.mrf.mxu0
    %569 = vdwg.mxu0
    %570 = vmatpush.bf16.msra.mxu0 %v450
    %571 = vmatpush.bf16.msra.mxu0 %v449
    %572 = vmatpush.bf16.msra.mxu0 %v448
    %573 = vmatpush.bf16.msra.mxu0 %v447
    %574 = vmatpush.bf16.msra.mxu0 %v446
    %575 = vmatpush.bf16.msra.mxu0 %v445
    %576 = vmatpush.bf16.msra.mxu0 %v444
    %577 = vmatpush.bf16.msra.mxu0 %v443
    %578 = vmatmul.bf16.gmra.mxu0 %v103
    %v579 = vpop.f32.mrf.mxu0
    %v580 = vadd.f32 %v567, %v579
    %v581 = vpop.f32.mrf.mxu0
    %582 = vdwg.mxu0
    %583 = vmatpush.bf16.msra.mxu0 0
    %584 = vmatpush.bf16.msra.mxu0 0
    %585 = vmatpush.bf16.msra.mxu0 0
    %586 = vmatpush.bf16.msra.mxu0 0
    %587 = vmatpush.bf16.msra.mxu0 0
    %588 = vmatpush.bf16.msra.mxu0 0
    %589 = vmatpush.bf16.msra.mxu0 0
    %590 = vmatpush.bf16.msra.mxu0 %v451
    %591 = vmatmul.bf16.gmra.mxu0 %v503
    %v592 = vpop.f32.mrf.mxu0
    %v593 = vadd.f32 %v580, %v592
    %v594 = vpop.f32.mrf.mxu0
    %595 = vdwg.mxu0
    %v596 = vmax.f32 %v593, 0.0
    %v597 = vpack.c.bf16 %v596, %v596
    %v598 = vld [vmem:[#allocation9] sm:$0xf]
    %v599 = vld [vmem:[#allocation9 + $0x4] sm:$0xf]
    %v600 = vld [vmem:[#allocation9 + $0x8] sm:$0xf]
    %v601 = vld [vmem:[#allocation9 + $0xc] sm:$0xf]
    %v602 = vld [vmem:[#allocation9 + $0x10] sm:$0xf]
    %v603 = vld [vmem:[#allocation9 + $0x14] sm:$0xf]
    %v604 = vld [vmem:[#allocation9 + $0x18] sm:$0xf]
    %v605 = vld [vmem:[#allocation9 + $0x1c] sm:$0xf]
    %v606 = vld [vmem:[#allocation9 + $0x20] sm:$0xf]
    %v607 = vld [vmem:[#allocation9 + $0x24] sm:$0xf]
    %v608 = vld [vmem:[#allocation9 + $0x28] sm:$0xf]
    %v609 = vld [vmem:[#allocation9 + $0x2c] sm:$0xf]
    %v610 = vld [vmem:[#allocation9 + $0x30] sm:$0xf]
    %v611 = vld [vmem:[#allocation9 + $0x34] sm:$0xf]
    %v612 = vld [vmem:[#allocation9 + $0x38] sm:$0xf]
    %v613 = vld [vmem:[#allocation9 + $0x3c] sm:$0xf]
    %v614 = vld [vmem:[%s5] sm:$0x1]
    %v616 = vperm.slane %v614, 0
    %v634 = vunpack.c.l.b16 %v598
    %v635 = vunpack.c.l.b16 %v599
    %v636 = vunpack.c.l.b16 %v600
    %v637 = vunpack.c.l.b16 %v601
    %v638 = vunpack.c.l.b16 %v602
    %v639 = vunpack.c.l.b16 %v603
    %v640 = vunpack.c.l.b16 %v604
    %v641 = vunpack.c.l.b16 %v605
    %v642 = vunpack.c.l.b16 %v606
    %v643 = vunpack.c.l.b16 %v607
    %v644 = vunpack.c.l.b16 %v608
    %v645 = vunpack.c.l.b16 %v609
    %v646 = vunpack.c.l.b16 %v610
    %v647 = vunpack.c.l.b16 %v611
    %v648 = vunpack.c.l.b16 %v612
    %v649 = vunpack.c.l.b16 %v613
    %v650 = vpack.c.b16 %v635, %v634
    %v651 = vpack.c.b16 %v637, %v636
    %v652 = vpack.c.b16 %v639, %v638
    %v653 = vpack.c.b16 %v641, %v640
    %v654 = vpack.c.b16 %v643, %v642
    %v655 = vpack.c.b16 %v645, %v644
    %v656 = vpack.c.b16 %v647, %v646
    %v657 = vpack.c.b16 %v649, %v648
    %666 = vmatpush.bf16.msra.mxu0 %v657
    %667 = vmatpush.bf16.msra.mxu0 %v656
    %668 = vmatpush.bf16.msra.mxu0 %v655
    %669 = vmatpush.bf16.msra.mxu0 %v654
    %670 = vmatpush.bf16.msra.mxu0 %v653
    %671 = vmatpush.bf16.msra.mxu0 %v652
    %672 = vmatpush.bf16.msra.mxu0 %v651
    %673 = vmatpush.bf16.msra.mxu0 %v650
    %674 = vmatmul.bf16.gmra.mxu0 %v597
    %v675 = vpop.f32.mrf.mxu0
    %v676 = vadd.f32 %v616, %v675
    %v677 = vpop.f32.mrf.mxu0
    %678 = vdwg.mxu0
    %v679 = vmax.f32 %v676, 0.0
    %v680 = vpack.c.bf16 %v679, %v679
    %v681 = vld [vmem:[#allocation10] sm:$0xf]
    %v682 = vld [vmem:[#allocation10 + $0x4] sm:$0xf]
    %v683 = vld [vmem:[#allocation10 + $0x8] sm:$0xf]
    %v684 = vld [vmem:[#allocation10 + $0xc] sm:$0xf]
    %v685 = vld [vmem:[#allocation10 + $0x10] sm:$0xf]
    %v686 = vld [vmem:[#allocation10 + $0x14] sm:$0xf]
    %v687 = vld [vmem:[#allocation10 + $0x18] sm:$0xf]
    %v688 = vld [vmem:[#allocation10 + $0x1c] sm:$0xf]
    %v689 = vld [vmem:[#allocation10 + $0x20] sm:$0xf]
    %v690 = vld [vmem:[#allocation10 + $0x24] sm:$0xf]
    %v691 = vld [vmem:[#allocation10 + $0x28] sm:$0xf]
    %v692 = vld [vmem:[#allocation10 + $0x2c] sm:$0xf]
    %v693 = vld [vmem:[#allocation10 + $0x30] sm:$0xf]
    %v694 = vld [vmem:[#allocation10 + $0x34] sm:$0xf]
    %v695 = vld [vmem:[#allocation10 + $0x38] sm:$0xf]
    %v696 = vld [vmem:[#allocation10 + $0x3c] sm:$0xf]
    %v697 = vld [vmem:[%s7] sm:$0x1]
    %v699 = vperm.slane %v697, 0
    %v717 = vunpack.c.l.b16 %v681
    %v718 = vunpack.c.l.b16 %v682
    %v719 = vunpack.c.l.b16 %v683
    %v720 = vunpack.c.l.b16 %v684
    %v721 = vunpack.c.l.b16 %v685
    %v722 = vunpack.c.l.b16 %v686
    %v723 = vunpack.c.l.b16 %v687
    %v724 = vunpack.c.l.b16 %v688
    %v725 = vunpack.c.l.b16 %v689
    %v726 = vunpack.c.l.b16 %v690
    %v727 = vunpack.c.l.b16 %v691
    %v728 = vunpack.c.l.b16 %v692
    %v729 = vunpack.c.l.b16 %v693
    %v730 = vunpack.c.l.b16 %v694
    %v731 = vunpack.c.l.b16 %v695
    %v732 = vunpack.c.l.b16 %v696
    %v733 = vpack.c.b16 %v718, %v717
    %v734 = vpack.c.b16 %v720, %v719
    %v735 = vpack.c.b16 %v722, %v721
    %v736 = vpack.c.b16 %v724, %v723
    %v737 = vpack.c.b16 %v726, %v725
    %v738 = vpack.c.b16 %v728, %v727
    %v739 = vpack.c.b16 %v730, %v729
    %v740 = vpack.c.b16 %v732, %v731
    %749 = vmatpush.bf16.msra.mxu0 %v740
    %750 = vmatpush.bf16.msra.mxu0 %v739
    %751 = vmatpush.bf16.msra.mxu0 %v738
    %752 = vmatpush.bf16.msra.mxu0 %v737
    %753 = vmatpush.bf16.msra.mxu0 %v736
    %754 = vmatpush.bf16.msra.mxu0 %v735
    %755 = vmatpush.bf16.msra.mxu0 %v734
    %756 = vmatpush.bf16.msra.mxu0 %v733
    %757 = vmatmul.bf16.gmra.mxu0 %v680
    %v758 = vpop.f32.mrf.mxu0
    %v759 = vadd.f32 %v699, %v758
    %v760 = vpop.f32.mrf.mxu0
    %761 = vdwg.mxu0
    %762 = vst [vmem:[#allocation12] sm:$0xff] %v759
    // Predicated region
    $region46: #{tpu_custom_call.1} parent=1 // pred_check
      _
    $region47: #{tpu_custom_call.1} parent=1 // pred_check_branch
      %764 = sbr.rel (0) target = $region49
    $region48: #{tpu_custom_call.1} parent=1 // pred_region
      %766 = vsyncadd [#allocation6], 0
      %s768 = sshll.u32 [#allocation12], 4
      %s769 = int_to_ptr.vmem [resolvable:$true] %s768
      %s770 = sshll.u32 %s8, 4
      %s771 = int_to_ptr.hbm [resolvable:$true] %s770
      %773 = dma.vmem_to_hbm [thread:$0]  %s769, 128, %s771, [#allocation6]
    $region49: #{tpu_custom_call.1} parent=1 // pred_fallthru
      _
    // Predicated region
    $region50: #{tpu_custom_call.1} parent=1 // pred_check
      _
    $region51: #{tpu_custom_call.1} parent=1 // pred_check_branch
      %775 = sbr.rel (0) target = $region53
    $region52: #{tpu_custom_call.1} parent=1 // pred_region
      %777 = dma.done [#allocation6], 128
    $region53: #{tpu_custom_call.1} parent=1 // pred_fallthru
      _
    %778 = vsyncpa [#allocation5], 1
    %779 = vsyncpa [#allocation8], 1
    %780 = vsyncpa [#allocation11], 1
    %781 = vsyncpa [#allocation6], 1

</llo_original>
